<compile_context>
chip_gen: v6e
topology: v6e:2x2x1
jax: 0.10.0
libtpu: 0.0.40
codegen_flags: <defaults>
</compile_context>

<pallas_src>
import math
import functools

import jax
import jax.numpy as jnp
from jax.experimental import pallas as pl
from jax.experimental.pallas import tpu as pltpu

_HALF_LOG_2PI = 0.5 * math.log(2.0 * math.pi)
_HIDDEN = 64          # per-network hidden width (actor / critic)
_H = 2 * _HIDDEN      # fused hidden width = 128 (one full lane group)
_OUT = 128            # lane-dense packed output width


def _policy_kernel(n_acts, s_ref, eps_ref, w1_ref, w2_ref, w3_ref, bias_ref, out_ref):
    s = s_ref[...]                                   # (TB, n_obs)
    eps = eps_ref[...]                               # (TB, 128), zero beyond n_acts

    b1 = bias_ref[0:1, :]                            # (1, 128)
    b2 = bias_ref[1:2, :]
    b3 = bias_ref[2:3, :]
    log_std = bias_ref[3:4, :]                       # log_std in lanes [0:n_acts], 0 elsewhere

    # ---- fused actor+critic MLP: 3 block matmuls, 2 tanh waves ----
    h = jnp.tanh(jnp.dot(s, w1_ref[...], preferred_element_type=jnp.float32) + b1)
    h = jnp.tanh(jnp.dot(h, w2_ref[...], preferred_element_type=jnp.float32) + b2)
    y = jnp.dot(h, w3_ref[...], preferred_element_type=jnp.float32) + b3    # (TB, 128)
    # y lanes [0:n_acts] = mean, lane n_acts = 0 (reserved for log_p), lane n_acts+1 = v

    lane = jax.lax.broadcasted_iota(jnp.int32, y.shape, 1)
    act_mask = lane < n_acts

    # ---- sample a = clamp(mean + std*eps, -1, 1) ----
    std = jnp.exp(log_std)
    a = jnp.clip(y + std * eps, -1.0, 1.0)

    # ---- normal_log_density(a, mean, log_std) summed over action lanes only ----
    diff = a - y
    ld = -diff * diff / (2.0 * std * std) - _HALF_LOG_2PI - log_std         # (TB, 128)
    log_p = jnp.sum(jnp.where(act_mask, ld, 0.0), axis=1, keepdims=True)    # (TB, 1)

    # ---- pack lane-dense output: [a | log_p | v | zeros] ----
    out = jnp.where(act_mask, a, 0.0)
    out = jnp.where(lane == n_acts, log_p, out)
    out = jnp.where(lane == n_acts + 1, y, out)      # y at lane n_acts+1 is v
    out_ref[...] = out


@functools.partial(jax.jit, static_argnames=("n_acts",))
def policy_forward(s, eps, packed, n_acts):
    """s: (B, n_obs), eps: (B, n_acts) ~ N(0,1). Returns (a, log_p, v)."""
    B, n_obs = s.shape

    # Lane-dense eps slab (zeros beyond n_acts so padded lanes stay inert).
    eps_p = jnp.zeros((B, _OUT), jnp.float32).at[:, :n_acts].set(eps.astype(jnp.float32))

    # Batch tile: 256-row M tiles feed the 256-wide v6e/v7x MXU well; fall back to
    # 128 (fine on v5e) or whole-batch for small/odd B.  (TB, 128)-f32 double-buffered
    # tiles stay far under even v7x's 32 MiB scoped VMEM.
    if B % 256 == 0:
        TB = 256
    elif B % 128 == 0:
        TB = 128
    else:
        TB = B
    grid = (B // TB,)

    resident = lambda i: (0, 0)          # weights stay VMEM-resident across batch tiles
    flops = 2 * B * (n_obs * _H + _H * _H + _H * _OUT)
    transcendentals = 3 * B * _H         # 2 tanh waves + exp
    bytes_accessed = 4 * (B * (n_obs + 2 * _OUT)
                          + n_obs * _H + _H * _H + _H * _OUT + 4 * _OUT)

    out = pl.pallas_call(
        functools.partial(_policy_kernel, n_acts),
        out_shape=jax.ShapeDtypeStruct((B, _OUT), jnp.float32),
        grid=grid,
        in_specs=[
            pl.BlockSpec((TB, n_obs), lambda i: (i, 0)),     # s
            pl.BlockSpec((TB, _OUT), lambda i: (i, 0)),      # eps (lane-dense)
            pl.BlockSpec((n_obs, _H), resident),             # fused layer-1 weight
            pl.BlockSpec((_H, _H), resident),                # fused layer-2 weight
            pl.BlockSpec((_H, _OUT), resident),              # fused layer-3 weight
            pl.BlockSpec((4, _OUT), resident),               # biases + log_std slab
        ],
        out_specs=pl.BlockSpec((TB, _OUT), lambda i: (i, 0)),
        compiler_params=pltpu.CompilerParams(dimension_semantics=("parallel",)),
        cost_estimate=pl.CostEstimate(flops=flops,
                                      transcendentals=transcendentals,
                                      bytes_accessed=bytes_accessed),
    )(s, eps_p, packed["w1f"], packed["w2f"], packed["w3f"], packed["bias"])

    a = out[:, :n_acts]
    log_p = out[:, n_acts:n_acts + 1]
    v = out[:, n_acts + 1:n_acts + 2]
    return a, log_p, v


def init_params(key, n_obs, n_acts, hidden=_HIDDEN):
    """Deterministic init mimicking PyTorch nn.Linear defaults (U(-1/sqrt(fan_in), ...))."""
    def linear(k, fan_in, fan_out):
        kw, kb = jax.random.split(k)
        bound = 1.0 / math.sqrt(fan_in)
        w = jax.random.uniform(kw, (fan_in, fan_out), jnp.float32, -bound, bound)
        b = jax.random.uniform(kb, (1, fan_out), jnp.float32, -bound, bound)
        return w, b

    keys = jax.random.split(key, 6)
    w1, b1 = linear(keys[0], n_obs, hidden)
    w2, b2 = linear(keys[1], hidden, hidden)
    w3, b3 = linear(keys[2], hidden, n_acts)
    cw1, cb1 = linear(keys[3], n_obs, hidden)
    cw2, cb2 = linear(keys[4], hidden, hidden)
    cw3, cb3 = linear(keys[5], hidden, 1)
    log_std = jnp.zeros((1, n_acts), jnp.float32)   # nn.Parameter(torch.zeros(1, n_acts))
    return dict(w1=w1, b1=b1, w2=w2, b2=b2, w3=w3, b3=b3,
                cw1=cw1, cb1=cb1, cw2=cw2, cb2=cb2, cw3=cw3, cb3=cb3,
                log_std=log_std)


def pack_params(p, n_acts, hidden=_HIDDEN):
    """Pack actor+critic params into fused block matrices (done once, outside the jit)."""
    w1f = jnp.concatenate([p["w1"], p["cw1"]], axis=1)                    # (n_obs, 128)

    w2f = jnp.zeros((_H, _H), jnp.float32)
    w2f = w2f.at[:hidden, :hidden].set(p["w2"])
    w2f = w2f.at[hidden:, hidden:].set(p["cw2"])                          # block-diag

    w3f = jnp.zeros((_H, _OUT), jnp.float32)
    w3f = w3f.at[:hidden, :n_acts].set(p["w3"])                           # mean -> lanes [0:n_acts]
    w3f = w3f.at[hidden:, n_acts + 1:n_acts + 2].set(p["cw3"])            # v -> lane n_acts+1

    bias = jnp.zeros((4, _OUT), jnp.float32)
    bias = bias.at[0, :_H].set(jnp.concatenate([p["b1"][0], p["cb1"][0]]))
    bias = bias.at[1, :_H].set(jnp.concatenate([p["b2"][0], p["cb2"][0]]))
    bias = bias.at[2, :n_acts].set(p["b3"][0])
    bias = bias.at[2, n_acts + 1].set(p["cb3"][0, 0])
    bias = bias.at[3, :n_acts].set(p["log_std"][0])
    return dict(w1f=w1f, w2f=w2f, w3f=w3f, bias=bias)


def _reference_forward(s, eps, p):
    """Pure-JAX reference (unfused) for correctness check."""
    h = jnp.tanh(s @ p["w1"] + p["b1"])
    h = jnp.tanh(h @ p["w2"] + p["b2"])
    mean = h @ p["w3"] + p["b3"]
    std = jnp.exp(p["log_std"])
    a = jnp.clip(mean + std * eps, -1.0, 1.0)
    var = std * std
    ld = -(a - mean) ** 2 / (2 * var) - _HALF_LOG_2PI - p["log_std"]
    log_p = jnp.sum(ld, axis=1, keepdims=True)
    hc = jnp.tanh(s @ p["cw1"] + p["cb1"])
    hc = jnp.tanh(hc @ p["cw2"] + p["cb2"])
    v = hc @ p["cw3"] + p["cb3"]
    return a, log_p, v


if __name__ == "__main__":
    B, n_obs, n_acts = 8, 32, 4

    key = jax.random.PRNGKey(0)
    k_params, k_s, k_eps = jax.random.split(key, 3)

    params = init_params(k_params, n_obs, n_acts)
    packed = pack_params(params, n_acts)

    s = jax.random.normal(k_s, (B, n_obs), jnp.float32)
    # torch.normal(mean, std) is stochastic; we draw eps ~ N(0,1) in glue and apply the
    # reparameterization a = mean + std * eps inside the kernel.
    eps = jax.random.normal(k_eps, (B, n_acts), jnp.float32)

    a, log_p, v = policy_forward(s, eps, packed, n_acts=n_acts)
    jax.block_until_ready((a, log_p, v))

    a_ref, lp_ref, v_ref = _reference_forward(s, eps, params)
    assert a.shape == (B, n_acts) and log_p.shape == (B, 1) and v.shape == (B, 1)
    assert jnp.allclose(a, a_ref, atol=1e-5)
    assert jnp.allclose(log_p, lp_ref, atol=1e-5)
    assert jnp.allclose(v, v_ref, atol=1e-5)

    print("KERNEL_OK")
</pallas_src>

<mosaic_0001>
module attributes {stable_mosaic.version = 11 : i64} {
  func.func @_policy_kernel(%arg0: i32, %arg1: memref<8x32xf32, #tpu.memory_space<vmem>>, %arg2: memref<8x128xf32, #tpu.memory_space<vmem>>, %arg3: memref<32x128xf32, #tpu.memory_space<vmem>>, %arg4: memref<128x128xf32, #tpu.memory_space<vmem>>, %arg5: memref<128x128xf32, #tpu.memory_space<vmem>>, %arg6: memref<4x128xf32, #tpu.memory_space<vmem>>, %arg7: memref<8x128xf32, #tpu.memory_space<vmem>>) attributes {dimension_semantics = [#tpu.dimension_semantics<parallel>], iteration_bounds = array<i64: 1>, scalar_prefetch = 0 : i64, scratch_operands = 0 : i64, tpu.core_type = #tpu.core_type<tc>, window_params = [{transform_indices = @transform_0, window_bounds = array<i64: 8, 32>}, {transform_indices = @transform_1, window_bounds = array<i64: 8, 128>}, {pipeline_mode = #tpu.pipeline_mode<synchronous>, transform_indices = @transform_2, window_bounds = array<i64: 32, 128>}, {pipeline_mode = #tpu.pipeline_mode<synchronous>, transform_indices = @transform_3, window_bounds = array<i64: 128, 128>}, {pipeline_mode = #tpu.pipeline_mode<synchronous>, transform_indices = @transform_4, window_bounds = array<i64: 128, 128>}, {pipeline_mode = #tpu.pipeline_mode<synchronous>, transform_indices = @transform_5, window_bounds = array<i64: 4, 128>}, {transform_indices = @transform_6, window_bounds = array<i64: 8, 128>}]} {
    %c0 = arith.constant 0 : index
    %c0_0 = arith.constant 0 : index
    %0 = vector.load %arg1[%c0, %c0_0] : memref<8x32xf32, #tpu.memory_space<vmem>>, vector<8x32xf32>
    %c0_1 = arith.constant 0 : index
    %c0_2 = arith.constant 0 : index
    %1 = vector.load %arg2[%c0_1, %c0_2] : memref<8x128xf32, #tpu.memory_space<vmem>>, vector<8x128xf32>
    %c0_3 = arith.constant 0 : index
    %c0_4 = arith.constant 0 : index
    %2 = vector.load %arg6[%c0_3, %c0_4] : memref<4x128xf32, #tpu.memory_space<vmem>>, vector<1x128xf32>
    %c1 = arith.constant 1 : index
    %c0_5 = arith.constant 0 : index
    %3 = vector.load %arg6[%c1, %c0_5] : memref<4x128xf32, #tpu.memory_space<vmem>>, vector<1x128xf32>
    %c2 = arith.constant 2 : index
    %c0_6 = arith.constant 0 : index
    %4 = vector.load %arg6[%c2, %c0_6] : memref<4x128xf32, #tpu.memory_space<vmem>>, vector<1x128xf32>
    %c3 = arith.constant 3 : index
    %c0_7 = arith.constant 0 : index
    %5 = vector.load %arg6[%c3, %c0_7] : memref<4x128xf32, #tpu.memory_space<vmem>>, vector<1x128xf32>
    %c0_8 = arith.constant 0 : index
    %c0_9 = arith.constant 0 : index
    %6 = vector.load %arg3[%c0_8, %c0_9] : memref<32x128xf32, #tpu.memory_space<vmem>>, vector<32x128xf32>
    %cst = arith.constant dense<0.000000e+00> : vector<8x128xf32>
    %7 = tpu.matmul %0, %6, %cst {dimension_numbers = #tpu.dot_dimension_numbers<[1], [0], [0], [1], [0, 0, 1, 1], [], []>} : vector<8x32xf32>, vector<32x128xf32>, vector<8x128xf32> -> vector<8x128xf32>
    %8 = vector.broadcast %2 : vector<1x128xf32> to vector<8x128xf32>
    %9 = arith.addf %7, %8 : vector<8x128xf32>
    %10 = math.tanh %9 : vector<8x128xf32>
    %c0_10 = arith.constant 0 : index
    %c0_11 = arith.constant 0 : index
    %11 = vector.load %arg4[%c0_10, %c0_11] : memref<128x128xf32, #tpu.memory_space<vmem>>, vector<128x128xf32>
    %cst_12 = arith.constant dense<0.000000e+00> : vector<8x128xf32>
    %12 = tpu.matmul %10, %11, %cst_12 {dimension_numbers = #tpu.dot_dimension_numbers<[1], [0], [0], [1], [0, 0, 1, 1], [], []>} : vector<8x128xf32>, vector<128x128xf32>, vector<8x128xf32> -> vector<8x128xf32>
    %13 = vector.broadcast %3 : vector<1x128xf32> to vector<8x128xf32>
    %14 = arith.addf %12, %13 : vector<8x128xf32>
    %15 = math.tanh %14 : vector<8x128xf32>
    %c0_13 = arith.constant 0 : index
    %c0_14 = arith.constant 0 : index
    %16 = vector.load %arg5[%c0_13, %c0_14] : memref<128x128xf32, #tpu.memory_space<vmem>>, vector<128x128xf32>
    %cst_15 = arith.constant dense<0.000000e+00> : vector<8x128xf32>
    %17 = tpu.matmul %15, %16, %cst_15 {dimension_numbers = #tpu.dot_dimension_numbers<[1], [0], [0], [1], [0, 0, 1, 1], [], []>} : vector<8x128xf32>, vector<128x128xf32>, vector<8x128xf32> -> vector<8x128xf32>
    %18 = vector.broadcast %4 : vector<1x128xf32> to vector<8x128xf32>
    %19 = arith.addf %17, %18 : vector<8x128xf32>
    %20 = tpu.iota {dimensions = array<i32: 1>} : vector<8x128xi32>
    %c4_i32 = arith.constant 4 : i32
    %21 = vector.broadcast %c4_i32 : i32 to vector<8x128xi32>
    %22 = arith.cmpi slt, %20, %21 : vector<8x128xi32>
    %23 = math.exp %5 : vector<1x128xf32>
    %24 = vector.broadcast %23 : vector<1x128xf32> to vector<8x128xf32>
    %25 = arith.mulf %24, %1 : vector<8x128xf32>
    %26 = arith.addf %19, %25 : vector<8x128xf32>
    %cst_16 = arith.constant -1.000000e+00 : f32
    %cst_17 = arith.constant 1.000000e+00 : f32
    %27 = vector.broadcast %cst_16 : f32 to vector<8x128xf32>
    %28 = arith.maximumf %27, %26 : vector<8x128xf32>
    %29 = vector.broadcast %cst_17 : f32 to vector<8x128xf32>
    %30 = arith.minimumf %29, %28 : vector<8x128xf32>
    %31 = arith.subf %30, %19 : vector<8x128xf32>
    %cst_18 = arith.constant 0.000000e+00 : f32
    %32 = vector.broadcast %cst_18 : f32 to vector<8x128xf32>
    %33 = arith.subf %32, %31 : vector<8x128xf32>
    %34 = arith.mulf %33, %31 : vector<8x128xf32>
    %cst_19 = arith.constant 2.000000e+00 : f32
    %35 = vector.broadcast %cst_19 : f32 to vector<1x128xf32>
    %36 = arith.mulf %35, %23 : vector<1x128xf32>
    %37 = arith.mulf %36, %23 : vector<1x128xf32>
    %38 = vector.broadcast %37 : vector<1x128xf32> to vector<8x128xf32>
    %39 = arith.divf %34, %38 : vector<8x128xf32>
    %cst_20 = arith.constant 0.918938517 : f32
    %40 = vector.broadcast %cst_20 : f32 to vector<8x128xf32>
    %41 = arith.subf %39, %40 : vector<8x128xf32>
    %42 = vector.broadcast %5 : vector<1x128xf32> to vector<8x128xf32>
    %43 = arith.subf %41, %42 : vector<8x128xf32>
    %cst_21 = arith.constant 0.000000e+00 : f32
    %44 = vector.broadcast %cst_21 : f32 to vector<8x128xf32>
    %45 = arith.select %22, %43, %44 : vector<8x128xi1>, vector<8x128xf32>
    %cst_22 = arith.constant dense<0.000000e+00> : vector<8xf32>
    %46 = vector.multi_reduction <add>, %45, %cst_22 [1] : vector<8x128xf32> to vector<8xf32>
    %47 = vector.shape_cast %46 : vector<8xf32> to vector<8x1xf32>
    %cst_23 = arith.constant 0.000000e+00 : f32
    %48 = vector.broadcast %cst_23 : f32 to vector<8x128xf32>
    %49 = arith.select %22, %30, %48 : vector<8x128xi1>, vector<8x128xf32>
    %c4_i32_24 = arith.constant 4 : i32
    %50 = vector.broadcast %c4_i32_24 : i32 to vector<8x128xi32>
    %51 = arith.cmpi eq, %20, %50 : vector<8x128xi32>
    %52 = vector.shape_cast %47 : vector<8x1xf32> to vector<8x1xf32>
    %53 = vector.broadcast %52 : vector<8x1xf32> to vector<8x128xf32>
    %54 = arith.select %51, %53, %49 : vector<8x128xi1>, vector<8x128xf32>
    %c5_i32 = arith.constant 5 : i32
    %55 = vector.broadcast %c5_i32 : i32 to vector<8x128xi32>
    %56 = arith.cmpi eq, %20, %55 : vector<8x128xi32>
    %57 = arith.select %56, %19, %54 : vector<8x128xi1>, vector<8x128xf32>
    %c0_25 = arith.constant 0 : index
    %c0_26 = arith.constant 0 : index
    %58 = vector.load %arg7[%c0_25, %c0_26] : memref<8x128xf32, #tpu.memory_space<vmem>>, vector<8x128xf32>
    tpu.vector_store %arg7[%c0_25, %c0_26], %57 {strides = array<i32>} : memref<8x128xf32, #tpu.memory_space<vmem>>, vector<8x128xf32>,
    return
  }
  func.func @transform_0(%arg0: i32) -> (i32, i32) {
    %c0_i32 = arith.constant 0 : i32
    %c0_i32_0 = arith.constant 0 : i32
    return %arg0, %c0_i32 : i32, i32
  }
  func.func @transform_1(%arg0: i32) -> (i32, i32) {
    %c0_i32 = arith.constant 0 : i32
    %c0_i32_0 = arith.constant 0 : i32
    return %arg0, %c0_i32 : i32, i32
  }
  func.func @transform_2(%arg0: i32) -> (i32, i32) {
    %c0_i32 = arith.constant 0 : i32
    %c0_i32_0 = arith.constant 0 : i32
    %c0_i32_1 = arith.constant 0 : i32
    return %c0_i32, %c0_i32_0 : i32, i32
  }
  func.func @transform_3(%arg0: i32) -> (i32, i32) {
    %c0_i32 = arith.constant 0 : i32
    %c0_i32_0 = arith.constant 0 : i32
    %c0_i32_1 = arith.constant 0 : i32
    return %c0_i32, %c0_i32_0 : i32, i32
  }
  func.func @transform_4(%arg0: i32) -> (i32, i32) {
    %c0_i32 = arith.constant 0 : i32
    %c0_i32_0 = arith.constant 0 : i32
    %c0_i32_1 = arith.constant 0 : i32
    return %c0_i32, %c0_i32_0 : i32, i32
  }
  func.func @transform_5(%arg0: i32) -> (i32, i32) {
    %c0_i32 = arith.constant 0 : i32
    %c0_i32_0 = arith.constant 0 : i32
    %c0_i32_1 = arith.constant 0 : i32
    return %c0_i32, %c0_i32_0 : i32, i32
  }
  func.func @transform_6(%arg0: i32) -> (i32, i32) {
    %c0_i32 = arith.constant 0 : i32
    %c0_i32_0 = arith.constant 0 : i32
    return %arg0, %c0_i32 : i32, i32
  }
}

</mosaic_0001>

<llo_original>
// kernel: policy_forward.1
$region0: #{policy_forward.1}
  #allocation0 [shape = 'u32[]', space=smem, size = 0x4, offset = 0x4, fixed_abs, tag = 'smem constant byte address 0x4 - core index']
  #allocation1 [shape = 'u32[144,128]{1,0:T(1,128)}', space=vmem, size = 0x12000, scoped, tag = 'internal scratch']
  %s0 = inlined_call_operand.vmem [shape: f32[8,32], index: 0, kind: input, shape index: {}]
  %s1 = inlined_call_operand.vmem [shape: f32[8,128], index: 1, kind: input, shape index: {}]
  %s2 = inlined_call_operand.vmem [shape: f32[32,128], index: 2, kind: input, shape index: {}]
  %s3 = inlined_call_operand.hbm [shape: f32[128,128], index: 3, kind: input, shape index: {}]
  %s4 = inlined_call_operand.hbm [shape: f32[128,128], index: 4, kind: input, shape index: {}]
  %s5 = inlined_call_operand.vmem [shape: f32[4,128], index: 5, kind: input, shape index: {}]
  %s6 = inlined_call_operand.vmem [shape: f32[8,128], index: 6, kind: output, shape index: {}]
  %s7 = sld [smem:[#allocation0]]
  $region42: #{policy_forward.1} parent=0
    _
  %s9 = ssub.s32 1, %s7
  %s10 = scalar_select 0, %s9, %s7
  $region1: #{policy_forward.1} parent=0
    #allocation2 [shape = 'u8[65536]{0}', space=vmem, size = 0x10000, scoped, tag = 'input window, operand 3, single buffered']
    #allocation3 [shape = 's32[1]{0}', space=sflag, size = 0x4, scoped, tag = 'scoped memory for policy_forward.1']
    #allocation4 [shape = 'u8[65536]{0}', space=vmem, size = 0x10000, scoped, tag = 'input window, operand 4, single buffered']
    #allocation5 [shape = 's32[1]{0}', space=sflag, size = 0x4, scoped, tag = 'scoped memory for policy_forward.1']
    %11 = vsyncpa [#allocation3], 0
    %12 = vsyncpa [#allocation5], 0
    // Predicated region
    $region2: #{policy_forward.1} parent=1 // pred_check
      _
    $region3: #{policy_forward.1} parent=1 // pred_check_branch
      %14 = sbr.rel (0) target = $region5
    $region4: #{policy_forward.1} parent=1 // pred_region
      _
    $region5: #{policy_forward.1} parent=1 // pred_fallthru
      _
    // Predicated region
    $region6: #{policy_forward.1} parent=1 // pred_check
      _
    $region7: #{policy_forward.1} parent=1 // pred_check_branch
      %16 = sbr.rel (0) target = $region9
    $region8: #{policy_forward.1} parent=1 // pred_region
      _
    $region9: #{policy_forward.1} parent=1 // pred_fallthru
      _
    // Predicated region
    $region10: #{policy_forward.1} parent=1 // pred_check
      _
    $region11: #{policy_forward.1} parent=1 // pred_check_branch
      %18 = sbr.rel (0) target = $region13
    $region12: #{policy_forward.1} parent=1 // pred_region
      _
    $region13: #{policy_forward.1} parent=1 // pred_fallthru
      _
    // Predicated region
    $region14: #{policy_forward.1} parent=1 // pred_check
      _
    $region15: #{policy_forward.1} parent=1 // pred_check_branch
      %20 = sbr.rel (0) target = $region17
    $region16: #{policy_forward.1} parent=1 // pred_region
      %s22 = ssub.s32 2048, 2048
      %23 = vsyncadd [#allocation3], %s22
      %s24 = sshll.u32 [#allocation2], 4
      %s25 = int_to_ptr.vmem [resolvable:$true] %s24
      %30 = dma.hbm_to_vmem [thread:$0]  %s3, 2048, %s25, [#allocation3], 128, 128, 8
    $region17: #{policy_forward.1} parent=1 // pred_fallthru
      _
    // Predicated region
    $region18: #{policy_forward.1} parent=1 // pred_check
      _
    $region19: #{policy_forward.1} parent=1 // pred_check_branch
      %32 = sbr.rel (0) target = $region21
    $region20: #{policy_forward.1} parent=1 // pred_region
      %s34 = ssub.s32 2048, 2048
      %35 = vsyncadd [#allocation5], %s34
      %s36 = sshll.u32 [#allocation4], 4
      %s37 = int_to_ptr.vmem [resolvable:$true] %s36
      %42 = dma.hbm_to_vmem [thread:$0]  %s4, 2048, %s37, [#allocation5], 128, 128, 8
    $region21: #{policy_forward.1} parent=1 // pred_fallthru
      _
    // Predicated region
    $region22: #{policy_forward.1} parent=1 // pred_check
      _
    $region23: #{policy_forward.1} parent=1 // pred_check_branch
      %44 = sbr.rel (0) target = $region25
    $region24: #{policy_forward.1} parent=1 // pred_region
      _
    $region25: #{policy_forward.1} parent=1 // pred_fallthru
      _
    // Predicated region
    $region26: #{policy_forward.1} parent=1 // pred_check
      _
    $region27: #{policy_forward.1} parent=1 // pred_check_branch
      %46 = sbr.rel (0) target = $region29
    $region28: #{policy_forward.1} parent=1 // pred_region
      %47 = dma.done [#allocation3], 2048
    $region29: #{policy_forward.1} parent=1 // pred_fallthru
      _
    // Predicated region
    $region30: #{policy_forward.1} parent=1 // pred_check
      _
    $region31: #{policy_forward.1} parent=1 // pred_check_branch
      %49 = sbr.rel (0) target = $region33
    $region32: #{policy_forward.1} parent=1 // pred_region
      %50 = dma.done [#allocation5], 2048
    $region33: #{policy_forward.1} parent=1 // pred_fallthru
      _
    %v51 = vld [vmem:[%s0] sm:$0xff]
    %v52 = vld [vmem:[%s1] sm:$0xff]
    %v53 = vld [vmem:[%s5] sm:$0x1]
    %v54 = vld [vmem:[%s5 + $0x1] sm:$0x1]
    %v55 = vld [vmem:[%s5 + $0x2] sm:$0x1]
    %v56 = vld [vmem:[%s5 + $0x3] sm:$0x1]
    %v57 = vld [vmem:[%s2] sm:$0xff]
    %v58 = vld [vmem:[%s2 + $0x8] sm:$0xff]
    %v59 = vld [vmem:[%s2 + $0x10] sm:$0xff]
    %v60 = vld [vmem:[%s2 + $0x18] sm:$0xff]
    %v61 = vlaneseq
    %v62 = vshrl.u32 %v61, 7
    %v63 = vsub.s32 0, %v62
    %v64 = vrot.slane %v53, %v63
    %vm65 = vcmask 261120
    %v67 = vsel %vm65, %v51, 0
    %69 = vmatprep.subr.mxu0 0.0
    %70 = vmatpush1.msra.mxu0 0.0
    %71 = vmatprep.subr.mxu0 0.0
    %72 = vmatpush1.msra.mxu0 0.0
    %73 = vmatprep.subr.mxu0 0.0
    %74 = vmatpush1.msra.mxu0 0.0
    %75 = vmatprep.subr.mxu0 0.0
    %76 = vmatpush1.msra.mxu0 0.0
    %77 = vmatprep.subr.mxu0 0.0
    %78 = vmatpush1.msra.mxu0 0.0
    %79 = vmatprep.subr.mxu0 0.0
    %80 = vmatpush1.msra.mxu0 0.0
    %81 = vmatprep.subr.mxu0 0.0
    %82 = vmatpush1.msra.mxu0 0.0
    %83 = vmatprep.subr.mxu0 0.0
    %84 = vmatpush1.msra.mxu0 0.0
    %85 = vmatprep.subr.mxu0 0.0
    %86 = vmatpush1.msra.mxu0 0.0
    %87 = vmatprep.subr.mxu0 0.0
    %88 = vmatpush1.msra.mxu0 0.0
    %89 = vmatprep.subr.mxu0 0.0
    %90 = vmatpush1.msra.mxu0 0.0
    %91 = vmatprep.subr.mxu0 0.0
    %92 = vmatpush1.msra.mxu0 0.0
    %93 = vmatprep.subr.mxu0 0.0
    %94 = vmatpush1.msra.mxu0 %v60
    %95 = vmatprep.subr.mxu0 0.0
    %96 = vmatpush1.msra.mxu0 %v59
    %97 = vmatprep.subr.mxu0 0.0
    %98 = vmatpush1.msra.mxu0 %v58
    %99 = vmatprep.subr.mxu0 0.0
    %100 = vmatpush1.msra.mxu0 %v57
    %101 = vmatprep.subr.mxu0 0.0
    %102 = vmatpush2.msra.mxu0 0.0
    %103 = vmatprep.subr.mxu0 0.0
    %104 = vmatpush2.msra.mxu0 0.0
    %105 = vmatprep.subr.mxu0 0.0
    %106 = vmatpush2.msra.mxu0 0.0
    %107 = vmatprep.subr.mxu0 0.0
    %108 = vmatpush2.msra.mxu0 0.0
    %109 = vmatprep.subr.mxu0 0.0
    %110 = vmatpush2.msra.mxu0 0.0
    %111 = vmatprep.subr.mxu0 0.0
    %112 = vmatpush2.msra.mxu0 0.0
    %113 = vmatprep.subr.mxu0 0.0
    %114 = vmatpush2.msra.mxu0 0.0
    %115 = vmatprep.subr.mxu0 0.0
    %116 = vmatpush2.msra.mxu0 0.0
    %117 = vmatprep.subr.mxu0 0.0
    %118 = vmatpush2.msra.mxu0 0.0
    %119 = vmatprep.subr.mxu0 0.0
    %120 = vmatpush2.msra.mxu0 0.0
    %121 = vmatprep.subr.mxu0 0.0
    %122 = vmatpush2.msra.mxu0 0.0
    %123 = vmatprep.subr.mxu0 0.0
    %124 = vmatpush2.msra.mxu0 0.0
    %125 = vmatprep.subr.mxu0 0.0
    %126 = vmatpush2.msra.mxu0 0.0
    %127 = vmatprep.subr.mxu0 0.0
    %128 = vmatpush2.msra.mxu0 0.0
    %129 = vmatprep.subr.mxu0 0.0
    %130 = vmatpush2.msra.mxu0 0.0
    %131 = vmatprep.subr.mxu0 0.0
    %132 = vmatpush2.msra.mxu0 0.0
    %133 = vmatprep.mubr.f32.mxu0 0.0
    %134 = vmatmul.mubr.f32.gmra.mxu0 %v67
    %v135 = vpop.f32.mrf.mxu0
    %v136 = vadd.f32 %v64, %v135
    %v137 = vpop.f32.mrf.mxu0
    %138 = vdwg.mxu0
    %v139 = vtanh.pop %v136
    %v140 = vld [vmem:[#allocation2] sm:$0xff]
    %v141 = vld [vmem:[#allocation2 + $0x8] sm:$0xff]
    %v142 = vld [vmem:[#allocation2 + $0x10] sm:$0xff]
    %v143 = vld [vmem:[#allocation2 + $0x18] sm:$0xff]
    %v144 = vld [vmem:[#allocation2 + $0x20] sm:$0xff]
    %v145 = vld [vmem:[#allocation2 + $0x28] sm:$0xff]
    %v146 = vld [vmem:[#allocation2 + $0x30] sm:$0xff]
    %v147 = vld [vmem:[#allocation2 + $0x38] sm:$0xff]
    %v148 = vld [vmem:[#allocation2 + $0x40] sm:$0xff]
    %v149 = vld [vmem:[#allocation2 + $0x48] sm:$0xff]
    %v150 = vld [vmem:[#allocation2 + $0x50] sm:$0xff]
    %v151 = vld [vmem:[#allocation2 + $0x58] sm:$0xff]
    %v152 = vld [vmem:[#allocation2 + $0x60] sm:$0xff]
    %v153 = vld [vmem:[#allocation2 + $0x68] sm:$0xff]
    %v154 = vld [vmem:[#allocation2 + $0x70] sm:$0xff]
    %v155 = vld [vmem:[#allocation2 + $0x78] sm:$0xff]
    %v156 = vlaneseq
    %v157 = vshrl.u32 %v156, 7
    %v158 = vsub.s32 0, %v157
    %v159 = vrot.slane %v54, %v158
    %160 = vmatprep.subr.mxu0 0.0
    %161 = vmatpush1.msra.mxu0 %v155
    %162 = vmatprep.subr.mxu0 0.0
    %163 = vmatpush1.msra.mxu0 %v154
    %164 = vmatprep.subr.mxu0 0.0
    %165 = vmatpush1.msra.mxu0 %v153
    %166 = vmatprep.subr.mxu0 0.0
    %167 = vmatpush1.msra.mxu0 %v152
    %168 = vmatprep.subr.mxu0 0.0
    %169 = vmatpush1.msra.mxu0 %v151
    %170 = vmatprep.subr.mxu0 0.0
    %171 = vmatpush1.msra.mxu0 %v150
    %172 = vmatprep.subr.mxu0 0.0
    %173 = vmatpush1.msra.mxu0 %v149
    %174 = vmatprep.subr.mxu0 0.0
    %175 = vmatpush1.msra.mxu0 %v148
    %176 = vmatprep.subr.mxu0 0.0
    %177 = vmatpush1.msra.mxu0 %v147
    %178 = vmatprep.subr.mxu0 0.0
    %179 = vmatpush1.msra.mxu0 %v146
    %180 = vmatprep.subr.mxu0 0.0
    %181 = vmatpush1.msra.mxu0 %v145
    %182 = vmatprep.subr.mxu0 0.0
    %183 = vmatpush1.msra.mxu0 %v144
    %184 = vmatprep.subr.mxu0 0.0
    %185 = vmatpush1.msra.mxu0 %v143
    %186 = vmatprep.subr.mxu0 0.0
    %187 = vmatpush1.msra.mxu0 %v142
    %188 = vmatprep.subr.mxu0 0.0
    %189 = vmatpush1.msra.mxu0 %v141
    %190 = vmatprep.subr.mxu0 0.0
    %191 = vmatpush1.msra.mxu0 %v140
    %192 = vmatprep.subr.mxu0 0.0
    %193 = vmatpush2.msra.mxu0 0.0
    %194 = vmatprep.subr.mxu0 0.0
    %195 = vmatpush2.msra.mxu0 0.0
    %196 = vmatprep.subr.mxu0 0.0
    %197 = vmatpush2.msra.mxu0 0.0
    %198 = vmatprep.subr.mxu0 0.0
    %199 = vmatpush2.msra.mxu0 0.0
    %200 = vmatprep.subr.mxu0 0.0
    %201 = vmatpush2.msra.mxu0 0.0
    %202 = vmatprep.subr.mxu0 0.0
    %203 = vmatpush2.msra.mxu0 0.0
    %204 = vmatprep.subr.mxu0 0.0
    %205 = vmatpush2.msra.mxu0 0.0
    %206 = vmatprep.subr.mxu0 0.0
    %207 = vmatpush2.msra.mxu0 0.0
    %208 = vmatprep.subr.mxu0 0.0
    %209 = vmatpush2.msra.mxu0 0.0
    %210 = vmatprep.subr.mxu0 0.0
    %211 = vmatpush2.msra.mxu0 0.0
    %212 = vmatprep.subr.mxu0 0.0
    %213 = vmatpush2.msra.mxu0 0.0
    %214 = vmatprep.subr.mxu0 0.0
    %215 = vmatpush2.msra.mxu0 0.0
    %216 = vmatprep.subr.mxu0 0.0
    %217 = vmatpush2.msra.mxu0 0.0
    %218 = vmatprep.subr.mxu0 0.0
    %219 = vmatpush2.msra.mxu0 0.0
    %220 = vmatprep.subr.mxu0 0.0
    %221 = vmatpush2.msra.mxu0 0.0
    %222 = vmatprep.subr.mxu0 0.0
    %223 = vmatpush2.msra.mxu0 0.0
    %224 = vmatprep.mubr.f32.mxu0 0.0
    %225 = vmatmul.mubr.f32.gmra.mxu0 %v139
    %v226 = vpop.f32.mrf.mxu0
    %v227 = vadd.f32 %v159, %v226
    %v228 = vpop.f32.mrf.mxu0
    %229 = vdwg.mxu0
    %v230 = vtanh.pop %v227
    %v231 = vld [vmem:[#allocation4] sm:$0xff]
    %v232 = vld [vmem:[#allocation4 + $0x8] sm:$0xff]
    %v233 = vld [vmem:[#allocation4 + $0x10] sm:$0xff]
    %v234 = vld [vmem:[#allocation4 + $0x18] sm:$0xff]
    %v235 = vld [vmem:[#allocation4 + $0x20] sm:$0xff]
    %v236 = vld [vmem:[#allocation4 + $0x28] sm:$0xff]
    %v237 = vld [vmem:[#allocation4 + $0x30] sm:$0xff]
    %v238 = vld [vmem:[#allocation4 + $0x38] sm:$0xff]
    %v239 = vld [vmem:[#allocation4 + $0x40] sm:$0xff]
    %v240 = vld [vmem:[#allocation4 + $0x48] sm:$0xff]
    %v241 = vld [vmem:[#allocation4 + $0x50] sm:$0xff]
    %v242 = vld [vmem:[#allocation4 + $0x58] sm:$0xff]
    %v243 = vld [vmem:[#allocation4 + $0x60] sm:$0xff]
    %v244 = vld [vmem:[#allocation4 + $0x68] sm:$0xff]
    %v245 = vld [vmem:[#allocation4 + $0x70] sm:$0xff]
    %v246 = vld [vmem:[#allocation4 + $0x78] sm:$0xff]
    %v247 = vlaneseq
    %v248 = vshrl.u32 %v247, 7
    %v249 = vsub.s32 0, %v248
    %v250 = vrot.slane %v55, %v249
    %251 = vmatprep.subr.mxu0 0.0
    %252 = vmatpush1.msra.mxu0 %v246
    %253 = vmatprep.subr.mxu0 0.0
    %254 = vmatpush1.msra.mxu0 %v245
    %255 = vmatprep.subr.mxu0 0.0
    %256 = vmatpush1.msra.mxu0 %v244
    %257 = vmatprep.subr.mxu0 0.0
    %258 = vmatpush1.msra.mxu0 %v243
    %259 = vmatprep.subr.mxu0 0.0
    %260 = vmatpush1.msra.mxu0 %v242
    %261 = vmatprep.subr.mxu0 0.0
    %262 = vmatpush1.msra.mxu0 %v241
    %263 = vmatprep.subr.mxu0 0.0
    %264 = vmatpush1.msra.mxu0 %v240
    %265 = vmatprep.subr.mxu0 0.0
    %266 = vmatpush1.msra.mxu0 %v239
    %267 = vmatprep.subr.mxu0 0.0
    %268 = vmatpush1.msra.mxu0 %v238
    %269 = vmatprep.subr.mxu0 0.0
    %270 = vmatpush1.msra.mxu0 %v237
    %271 = vmatprep.subr.mxu0 0.0
    %272 = vmatpush1.msra.mxu0 %v236
    %273 = vmatprep.subr.mxu0 0.0
    %274 = vmatpush1.msra.mxu0 %v235
    %275 = vmatprep.subr.mxu0 0.0
    %276 = vmatpush1.msra.mxu0 %v234
    %277 = vmatprep.subr.mxu0 0.0
    %278 = vmatpush1.msra.mxu0 %v233
    %279 = vmatprep.subr.mxu0 0.0
    %280 = vmatpush1.msra.mxu0 %v232
    %281 = vmatprep.subr.mxu0 0.0
    %282 = vmatpush1.msra.mxu0 %v231
    %283 = vmatprep.subr.mxu0 0.0
    %284 = vmatpush2.msra.mxu0 0.0
    %285 = vmatprep.subr.mxu0 0.0
    %286 = vmatpush2.msra.mxu0 0.0
    %287 = vmatprep.subr.mxu0 0.0
    %288 = vmatpush2.msra.mxu0 0.0
    %289 = vmatprep.subr.mxu0 0.0
    %290 = vmatpush2.msra.mxu0 0.0
    %291 = vmatprep.subr.mxu0 0.0
    %292 = vmatpush2.msra.mxu0 0.0
    %293 = vmatprep.subr.mxu0 0.0
    %294 = vmatpush2.msra.mxu0 0.0
    %295 = vmatprep.subr.mxu0 0.0
    %296 = vmatpush2.msra.mxu0 0.0
    %297 = vmatprep.subr.mxu0 0.0
    %298 = vmatpush2.msra.mxu0 0.0
    %299 = vmatprep.subr.mxu0 0.0
    %300 = vmatpush2.msra.mxu0 0.0
    %301 = vmatprep.subr.mxu0 0.0
    %302 = vmatpush2.msra.mxu0 0.0
    %303 = vmatprep.subr.mxu0 0.0
    %304 = vmatpush2.msra.mxu0 0.0
    %305 = vmatprep.subr.mxu0 0.0
    %306 = vmatpush2.msra.mxu0 0.0
    %307 = vmatprep.subr.mxu0 0.0
    %308 = vmatpush2.msra.mxu0 0.0
    %309 = vmatprep.subr.mxu0 0.0
    %310 = vmatpush2.msra.mxu0 0.0
    %311 = vmatprep.subr.mxu0 0.0
    %312 = vmatpush2.msra.mxu0 0.0
    %313 = vmatprep.subr.mxu0 0.0
    %314 = vmatpush2.msra.mxu0 0.0
    %315 = vmatprep.mubr.f32.mxu0 0.0
    %316 = vmatmul.mubr.f32.gmra.mxu0 %v230
    %v317 = vpop.f32.mrf.mxu0
    %v318 = vadd.f32 %v250, %v317
    %v319 = vpop.f32.mrf.mxu0
    %320 = vdwg.mxu0
    %v321 = vlaneseq
    %v322 = vand.u32 %v321, 127
    %vm323 = vcmp.lt.s32.totalorder %v322, 4
    %v324 = vmul.f32 %v56, 1.442695
    %v325 = vpow.pop %v324
    %v326 = vlaneseq
    %v327 = vshrl.u32 %v326, 7
    %v328 = vsub.s32 0, %v327
    %v329 = vrot.slane %v325, %v328
    %v330 = vmul.f32 %v329, %v52
    %v331 = vadd.f32 %v318, %v330
    %v332 = vmax.f32 %v331, -1.0
    %v333 = vmin.f32 %v332, 1.0
    %v334 = vsub.f32 %v333, %v318
    %v335 = vsub.f32 0.0, %v334
    %v336 = vmul.f32 %v335, %v334
    %v337 = vmul.f32 %v325, 2.0
    %v338 = vmul.f32 %v337, %v325
    %v339 = vlaneseq
    %v340 = vshrl.u32 %v339, 7
    %v341 = vsub.s32 0, %v340
    %v342 = vrot.slane %v338, %v341
    %v343 = vrcp.pop %v342
    %v344 = vmul.f32 %v336, %v343
    %v345 = vsub.f32 %v344, 0.9189385
    %v346 = vlaneseq
    %v347 = vshrl.u32 %v346, 7
    %v348 = vsub.s32 0, %v347
    %v349 = vrot.slane %v56, %v348
    %v350 = vsub.f32 %v345, %v349
    %v351 = vsel %vm323, %v350, 0.0
    %352 = vadd.xlane.f32.xlu0 %v351
    %v353 = vpop.xlane.xlu0 %352
    %v354 = vsel %vm323, %v333, 0.0
    %vm355 = vcmp.eq.s32.totalorder %v322, 4
    %v356 = vsel %vm355, %v353, %v354
    %vm357 = vcmp.eq.s32.totalorder %v322, 5
    %v358 = vsel %vm357, %v318, %v356
    %359 = vst [vmem:[%s6] sm:$0xff] %v358
    // Predicated region
    $region34: #{policy_forward.1} parent=1 // pred_check
      _
    $region35: #{policy_forward.1} parent=1 // pred_check_branch
      %361 = sbr.rel (0) target = $region37
    $region36: #{policy_forward.1} parent=1 // pred_region
      _
    $region37: #{policy_forward.1} parent=1 // pred_fallthru
      _
    // Predicated region
    $region38: #{policy_forward.1} parent=1 // pred_check
      _
    $region39: #{policy_forward.1} parent=1 // pred_check_branch
      %363 = sbr.rel (0) target = $region41
    $region40: #{policy_forward.1} parent=1 // pred_region
      _
    $region41: #{policy_forward.1} parent=1 // pred_fallthru
      _
    %364 = vsyncpa [#allocation3], 1
    %365 = vsyncpa [#allocation5], 1

</llo_original>
